<compile_context>
chip_gen: v7x
topology: tpu7x:2x2x1
jax: 0.10.0
libtpu: 0.0.40
codegen_flags: <defaults>
</compile_context>

<pallas_src>
import math

import jax
import jax.numpy as jnp
from jax.experimental import pallas as pl
from jax.experimental.pallas import tpu as pltpu


_TARGET_TILE_BYTES = 2 * 1024 * 1024  # ~2 MiB x-tile: >85% HBM roofline, v5e-safe working set


def _add_pe_kernel_3d(x_ref, pe_ref, o_ref):
    # x_ref / o_ref: (ts, tb, D) VMEM tiles; pe_ref: (ts, 1, D).
    # pe loaded once per tile, broadcast over batch (sublane) axis in VMEM,
    # single fused VPU add + lane-dense store. No per-tile dtype cast.
    o_ref[...] = x_ref[...] + pe_ref[...]


def _add_pe_kernel_2d(x_ref, pe_ref, o_ref):
    # Lane-dense path for small-B / small-D shapes.
    # x_ref / o_ref: (ts, B*D); pe_ref: (ts, D). pe is tiled across batch inside
    # VMEM (cheap: this path only triggers for small B*D), so pe HBM traffic stays
    # at (S, D) and the output store is fully lane-dense.
    reps = x_ref.shape[1] // pe_ref.shape[1]
    o_ref[...] = x_ref[...] + jnp.tile(pe_ref[...], (1, reps))


def make_positional_encoding(d_model: int, max_len: int = 640, dtype=jnp.float32) -> jax.Array:
    """Builds the (max_len, 1, d_model) sin/cos table, same as the PyTorch buffer."""
    position = jnp.arange(max_len, dtype=jnp.float32)[:, None]                  # (L, 1)
    div_term = jnp.exp(
        jnp.arange(0, d_model, 2, dtype=jnp.float32) * (-math.log(10000.0) / d_model)
    )                                                                            # (ceil(D/2),)
    angles = position * div_term                                                 # (L, ceil(D/2))
    pe = jnp.zeros((max_len, d_model), dtype=jnp.float32)
    pe = pe.at[:, 0::2].set(jnp.sin(angles))
    pe = pe.at[:, 1::2].set(jnp.cos(angles)[:, : d_model // 2])
    return pe[:, None, :].astype(dtype)                                          # (L, 1, D)


def positional_encoding_forward(x: jax.Array, pe: jax.Array, *, donate_x: bool = False) -> jax.Array:
    """x: (S, B, D), pe: (max_len, 1, D)  ->  x + pe[:S]   (dropout = identity, eval mode).

    The add is performed in x.dtype (pe cast once here); this only deviates from
    PyTorch type promotion when x is lower precision than the f32 table.
    """
    # TODO(synk): training-mode nn.Dropout(p=0.1) (stochastic) is not implemented;
    #             eval-mode forward (identity dropout) is what this kernel computes.
    s, b, d = x.shape
    assert pe.ndim == 3 and pe.shape[1] == 1 and pe.shape[2] == d and pe.shape[0] >= s

    if pe.dtype != x.dtype:
        pe = pe.astype(x.dtype)  # one-time cast of the small table (halves pe DMA for bf16 x)

    itemsize = jnp.dtype(x.dtype).itemsize
    total_bytes = s * b * d * itemsize
    sublanes = (8 * 4) // itemsize  # rows packed per vreg sublane: f32->8, bf16->16, int8->32

    io_aliases = {0: 0} if donate_x else {}
    cost = pl.CostEstimate(
        flops=s * b * d,
        transcendentals=0,
        bytes_accessed=2 * s * b * d * itemsize + s * d * itemsize,
    )

    small_shape = (b < sublanes) or (d < 128)

    if small_shape:
        # ---- lane-dense 2D path: (S, B*D) blocks, pe tiled across B inside VMEM ----
        bd = b * d
        row_bytes = bd * itemsize
        ts = max(1, min(s, _TARGET_TILE_BYTES // max(1, row_bytes)))
        if ts < s:
            ts = min(s, max(8, (ts // 8) * 8))          # keep sublane block dim 8-aligned
        if pl.cdiv(s, ts) == 1 and total_bytes >= (1 << 20) and s >= 16:
            ts = ((pl.cdiv(s, 2) + 7) // 8) * 8         # >=2 parallel steps -> both v7x TCs

        x2 = x.reshape(s, bd)
        pe2 = pe.reshape(pe.shape[0], d)                # full table, no pe[:s] HBM copy

        out2 = pl.pallas_call(
            _add_pe_kernel_2d,
            out_shape=jax.ShapeDtypeStruct((s, bd), x.dtype),
            grid_spec=pltpu.PrefetchScalarGridSpec(
                num_scalar_prefetch=0,
                grid=(pl.cdiv(s, ts),),
                in_specs=[pl.BlockSpec((ts, bd), lambda i: (i, 0)),
                          pl.BlockSpec((ts, d), lambda i: (i, 0))],
                out_specs=pl.BlockSpec((ts, bd), lambda i: (i, 0)),
            ),
            compiler_params=pltpu.CompilerParams(dimension_semantics=("parallel",)),
            cost_estimate=cost,
            input_output_aliases=io_aliases,
        )(x2, pe2)
        return out2.reshape(s, b, d)

    # ---- main 3D path: (ts, tb, D) blocks; split batch if one (B, D) slab is too big ----
    row_bytes = d * itemsize
    if b * row_bytes <= _TARGET_TILE_BYTES:
        tb = b
    else:
        # One full (B, D) slab exceeds the per-step budget -> split the batch axis
        # (8-aligned for the sublane constraint) instead of blowing scoped VMEM.
        # TODO(synk): extremely large D (> ~64K f32 per 8-row slab) would also need a D split.
        tb = min(b, max(8, ((_TARGET_TILE_BYTES // row_bytes) // 8) * 8))
    ts = max(1, min(s, _TARGET_TILE_BYTES // max(1, tb * row_bytes)))
    if pl.cdiv(s, ts) * pl.cdiv(b, tb) == 1 and s >= 2 and total_bytes >= (1 << 20):
        ts = pl.cdiv(s, 2)                              # >=2 parallel steps -> both v7x TCs

    grid = (pl.cdiv(s, ts), pl.cdiv(b, tb))
    return pl.pallas_call(
        _add_pe_kernel_3d,
        out_shape=jax.ShapeDtypeStruct((s, b, d), x.dtype),
        grid_spec=pltpu.PrefetchScalarGridSpec(
            num_scalar_prefetch=0,
            grid=grid,
            in_specs=[pl.BlockSpec((ts, tb, d), lambda i, j: (i, j, 0)),
                      pl.BlockSpec((ts, 1, d), lambda i, j: (i, 0, 0))],
            out_specs=pl.BlockSpec((ts, tb, d), lambda i, j: (i, j, 0)),
        ),
        compiler_params=pltpu.CompilerParams(dimension_semantics=("parallel", "parallel")),
        cost_estimate=cost,
        input_output_aliases=io_aliases,
    )(x, pe)


if __name__ == "__main__":
    key = jax.random.PRNGKey(0)
    k0, k1 = jax.random.split(key)

    # Small shapes consistent with the module: seq=8, batch=2, d_model=32, max_len=640.
    seq_len, batch, d_model, max_len = 8, 2, 32, 640
    x = jax.random.normal(k0, (seq_len, batch, d_model), dtype=jnp.float32)
    pe = make_positional_encoding(d_model, max_len=max_len, dtype=jnp.float32)

    out = jax.block_until_ready(positional_encoding_forward(x, pe))
    ref = x + pe[:seq_len]                               # == PyTorch eval-mode forward
    assert out.shape == x.shape and out.dtype == x.dtype
    assert bool(jnp.allclose(out, ref, rtol=0.0, atol=0.0)), "2D-path mismatch vs reference"

    # Also exercise the main (ts, tb, D) path with a still-small lane-dense shape.
    s2, b2, d2 = 16, 8, 128
    x2 = jax.random.normal(k1, (s2, b2, d2), dtype=jnp.float32)
    pe2 = make_positional_encoding(d2, max_len=max_len, dtype=jnp.float32)
    out2 = jax.block_until_ready(positional_encoding_forward(x2, pe2))
    ref2 = x2 + pe2[:s2]
    assert bool(jnp.allclose(out2, ref2, rtol=0.0, atol=0.0)), "3D-path mismatch vs reference"

    print("KERNEL_OK")
</pallas_src>

<mosaic_0001>
module attributes {stable_mosaic.version = 11 : i64} {
  func.func @_add_pe_kernel_2d(%arg0: i32, %arg1: memref<8x64xf32, #tpu.memory_space<vmem>>, %arg2: memref<8x32xf32, #tpu.memory_space<vmem>>, %arg3: memref<8x64xf32, #tpu.memory_space<vmem>>) attributes {dimension_semantics = [#tpu.dimension_semantics<parallel>], iteration_bounds = array<i64: 1>, scalar_prefetch = 0 : i64, scratch_operands = 0 : i64, tpu.core_type = #tpu.core_type<tc>, window_params = [{transform_indices = @transform_0, window_bounds = array<i64: 8, 64>}, {transform_indices = @transform_1, window_bounds = array<i64: 8, 32>}, {transform_indices = @transform_2, window_bounds = array<i64: 8, 64>}]} {
    %c0 = arith.constant 0 : index
    %c0_0 = arith.constant 0 : index
    %0 = vector.load %arg1[%c0, %c0_0] : memref<8x64xf32, #tpu.memory_space<vmem>>, vector<8x64xf32>
    %c0_1 = arith.constant 0 : index
    %c0_2 = arith.constant 0 : index
    %1 = vector.load %arg2[%c0_1, %c0_2] : memref<8x32xf32, #tpu.memory_space<vmem>>, vector<8x32xf32>
    %2 = tpu.concatenate %1, %1 in 1 : vector<8x32xf32>, vector<8x32xf32> -> vector<8x64xf32>
    %3 = arith.addf %0, %2 : vector<8x64xf32>
    %c0_3 = arith.constant 0 : index
    %c0_4 = arith.constant 0 : index
    %4 = vector.load %arg3[%c0_3, %c0_4] : memref<8x64xf32, #tpu.memory_space<vmem>>, vector<8x64xf32>
    tpu.vector_store %arg3[%c0_3, %c0_4], %3 {strides = array<i32>} : memref<8x64xf32, #tpu.memory_space<vmem>>, vector<8x64xf32>,
    return
  }
  func.func @transform_0(%arg0: i32) -> (i32, i32) {
    %c0_i32 = arith.constant 0 : i32
    %c0_i32_0 = arith.constant 0 : i32
    return %arg0, %c0_i32 : i32, i32
  }
  func.func @transform_1(%arg0: i32) -> (i32, i32) {
    %c0_i32 = arith.constant 0 : i32
    %c0_i32_0 = arith.constant 0 : i32
    return %arg0, %c0_i32 : i32, i32
  }
  func.func @transform_2(%arg0: i32) -> (i32, i32) {
    %c0_i32 = arith.constant 0 : i32
    %c0_i32_0 = arith.constant 0 : i32
    return %arg0, %c0_i32 : i32, i32
  }
}

</mosaic_0001>

<llo_original>
// kernel: tpu_custom_call.1
$region0: #{tpu_custom_call.1}
  #allocation0 [shape = 'u32[]', space=smem, size = 0x4, offset = 0x4, fixed_abs, tag = 'smem constant byte address 0x4 - core index']
  #allocation1 [shape = 'u32[144,128]{1,0:T(1,128)}', space=vmem, size = 0x12000, scoped, tag = 'internal scratch']
  %s0 = inlined_call_operand.vmem [shape: f32[8,64], index: 0, kind: input, shape index: {}]
  %s1 = inlined_call_operand.vmem [shape: f32[640,32], index: 1, kind: input, shape index: {}]
  %s2 = inlined_call_operand.hbm [shape: f32[8,64], index: 2, kind: output, shape index: {}]
  %s3 = sld [smem:[#allocation0]]
  $region18: #{tpu_custom_call.1} parent=0
    _
  %s5 = ssub.s32 1, %s3
  %s6 = scalar_select 0, %s5, %s3
  $region1: #{tpu_custom_call.1} parent=0
    #allocation2 [shape = 'u8[4096]{0}', space=vmem, size = 0x1000, scoped, tag = 'output window, operand 0, single buffered']
    #allocation3 [shape = 's32[1]{0}', space=sflag, size = 0x4, scoped, tag = 'scoped memory for tpu_custom_call.1']
    %7 = vsyncpa [#allocation3], 0
    // Predicated region
    $region2: #{tpu_custom_call.1} parent=1 // pred_check
      _
    $region3: #{tpu_custom_call.1} parent=1 // pred_check_branch
      %9 = sbr.rel (0) target = $region5
    $region4: #{tpu_custom_call.1} parent=1 // pred_region
      _
    $region5: #{tpu_custom_call.1} parent=1 // pred_fallthru
      _
    // Predicated region
    $region6: #{tpu_custom_call.1} parent=1 // pred_check
      _
    $region7: #{tpu_custom_call.1} parent=1 // pred_check_branch
      %11 = sbr.rel (0) target = $region9
    $region8: #{tpu_custom_call.1} parent=1 // pred_region
      _
    $region9: #{tpu_custom_call.1} parent=1 // pred_fallthru
      _
    %v12 = vld [vmem:[%s0] sm:$0xff]
    %v13 = vld [vmem:[%s1] sm:$0xff]
    %15 = vrot.lane.b32.xlu0 %v13, 32
    %v16 = vpop.permute.xlu0 %15
    %vm18 = vcmask 261120
    %v19 = vsel %vm18, %v13, %v16
    %v20 = vadd.f32 %v12, %v19
    %vm21 = vcmask 523264
    %22 = vst.msk [vmem:[#allocation2] sm:$0xff] %vm21, %v20
    // Predicated region
    $region10: #{tpu_custom_call.1} parent=1 // pred_check
      _
    $region11: #{tpu_custom_call.1} parent=1 // pred_check_branch
      %24 = sbr.rel (0) target = $region13
    $region12: #{tpu_custom_call.1} parent=1 // pred_region
      %s26 = ssub.s32 128, 128
      %27 = vsyncadd [#allocation3], %s26
      %s29 = sshll.u32 [#allocation2], 4
      %s30 = int_to_ptr.vmem [resolvable:$true] %s29
      %32 = dma.vmem_to_hbm [thread:$0]  %s30, 128, %s2, [#allocation3]
    $region13: #{tpu_custom_call.1} parent=1 // pred_fallthru
      _
    // Predicated region
    $region14: #{tpu_custom_call.1} parent=1 // pred_check
      _
    $region15: #{tpu_custom_call.1} parent=1 // pred_check_branch
      %34 = sbr.rel (0) target = $region17
    $region16: #{tpu_custom_call.1} parent=1 // pred_region
      %35 = dma.done [#allocation3], 128
    $region17: #{tpu_custom_call.1} parent=1 // pred_fallthru
      _
    %36 = vsyncpa [#allocation3], 1

</llo_original>
